<compile_context>
chip_gen: v6e
topology: v6e:2x2x1
jax: 0.10.0
libtpu: 0.0.40
codegen_flags: <defaults>
</compile_context>

<pallas_src>
import math

import numpy as np

import jax
import jax.numpy as jnp
from jax.experimental import pallas as pl
from jax.experimental.pallas import tpu as pltpu

LANES = 128
_VMEM_CAP = 40 << 20  # generation-safe scoped-VMEM cap (v7x: 64 MiB physical / TC)


def _make_kernel(br, rows, num_slices, inner_steps):
    """Build the accumulation kernel (all tiling params are Python constants)."""
    partial = (rows % br) != 0  # does the globally-last block have invalid rows?
    groups = br // 8

    def _accumulate(o_ref, x, t):
        # x, t: (br, LANES) f32.  nn.BCELoss semantics: clamp log at -100.
        # Zero rows/lanes (x=0, t=0) contribute exactly 0 to every quantity:
        #   t*(log_x - log_1mx) + log_1mx = 0*(-100-0) + 0 = 0,  x*t = 0,  x+t = 0.
        log_x = jnp.maximum(jnp.log(x), -100.0)
        log_1mx = jnp.maximum(jnp.log(1.0 - x), -100.0)
        neg_bce = t * (log_x - log_1mx) + log_1mx  # == -bce per element

        # Sublane-partial accumulation: (br,128) -> (groups,8,128) regroups whole
        # (8,128) vreg tiles (layout-preserving), the axis-0 sum is pure vreg adds,
        # and each += targets a full unmasked (8,128) tile of the resident output.
        o_ref[0, :, :] += neg_bce.reshape(groups, 8, LANES).sum(axis=0)
        o_ref[1, :, :] += (x * t).reshape(groups, 8, LANES).sum(axis=0)
        o_ref[2, :, :] += (x + t).reshape(groups, 8, LANES).sum(axis=0)

    def kernel(x_ref, t_ref, o_ref):
        c = pl.program_id(0)  # parallel accumulator slot
        j = pl.program_id(1)  # reduction axis (last grid axis)

        @pl.when(j == 0)
        def _():
            o_ref[...] = jnp.zeros_like(o_ref)

        if not partial:
            _accumulate(
                o_ref, x_ref[...].astype(jnp.float32), t_ref[...].astype(jnp.float32)
            )
        else:
            # Only the globally-last block can contain out-of-bounds (garbage)
            # rows; every other step runs the lean unmasked path.
            is_tail = (c == num_slices - 1) & (j == inner_steps - 1)

            @pl.when(jnp.logical_not(is_tail))
            def _():
                _accumulate(
                    o_ref,
                    x_ref[...].astype(jnp.float32),
                    t_ref[...].astype(jnp.float32),
                )

            @pl.when(is_tail)
            def _():
                x = x_ref[...].astype(jnp.float32)
                t = t_ref[...].astype(jnp.float32)
                row0 = (c * inner_steps + j) * br
                rid = jax.lax.broadcasted_iota(jnp.int32, (br, LANES), 0) + row0
                valid = rid < rows
                # Mask BEFORE compute so garbage rows become exact zeros (which
                # contribute 0 under the clamp-before-multiply formulation).
                _accumulate(
                    o_ref, jnp.where(valid, x, 0.0), jnp.where(valid, t, 0.0)
                )

    return kernel


def dice_bce_loss(inputs, targets, *, block_rows=4096, num_slices=2):
    """DiceBCELoss.forward(inputs, targets) -> scalar f32 (inputs are probabilities)."""
    assert inputs.shape == targets.shape
    # TODO(synk): nn.BCELoss(weight=...) per-element weighting not implemented
    # (the module's default weight=None path is what is implemented here).
    n = int(math.prod(inputs.shape))
    assert n > 0
    rows = pl.cdiv(n, LANES)
    itemsizes = inputs.dtype.itemsize + targets.dtype.itemsize

    # Largest lane-dense tile that fits (sublane dim multiple of 8), shrunk if
    # the VMEM estimate would exceed the generation-safe cap.
    br = min(int(block_rows), 8 * pl.cdiv(rows, 8))
    br = max(8, (br // 8) * 8)

    def _vmem_est(b):
        in_blocks = 2 * b * LANES * itemsizes  # double-buffered x & t tiles
        f32_temps = 8 * b * LANES * 4          # in-kernel f32 temporaries
        return in_blocks + f32_temps + (2 << 20)

    while _vmem_est(br) > _VMEM_CAP and br > 8:
        br = max(8, ((br // 2) // 8) * 8)

    blocks_total = pl.cdiv(rows, br)
    if blocks_total < num_slices or blocks_total % num_slices != 0:
        num_slices = 1
    inner_steps = blocks_total // num_slices

    total = rows * LANES

    def _prep(a):
        flat = a.reshape(-1)
        if total != n:
            # Only lane-ragged element counts (n % 128 != 0) need a pad so the
            # (rows, 128) reshape is legal; row-raggedness is masked in-kernel
            # with zero extra HBM traffic.
            flat = jnp.pad(flat, (0, total - n))
        return flat.reshape(rows, LANES)

    x2d = _prep(inputs)
    t2d = _prep(targets)

    vmem_limit = int(min(_VMEM_CAP, max(16 << 20, _vmem_est(br))))

    cost = pl.CostEstimate(
        flops=9 * n,
        transcendentals=2 * n,
        bytes_accessed=total * itemsizes + num_slices * 3 * 8 * LANES * 4,
    )

    kernel = _make_kernel(br, rows, num_slices, inner_steps)

    # TODO(synk): on v7x, verify the outer "parallel" axis actually shards the
    # two slices across both TensorCores; if not, switch to pltpu.CORE_PARALLEL.
    partials = pl.pallas_call(
        kernel,
        out_shape=jax.ShapeDtypeStruct((num_slices, 3, 8, LANES), jnp.float32),
        grid_spec=pltpu.PrefetchScalarGridSpec(
            num_scalar_prefetch=0,
            grid=(num_slices, inner_steps),
            in_specs=[
                pl.BlockSpec((br, LANES), lambda c, j: (c * inner_steps + j, 0)),
                pl.BlockSpec((br, LANES), lambda c, j: (c * inner_steps + j, 0)),
            ],
            out_specs=pl.BlockSpec((None, 3, 8, LANES), lambda c, j: (c, 0, 0, 0)),
        ),
        compiler_params=pltpu.CompilerParams(
            dimension_semantics=("parallel", "arbitrary"),
            vmem_limit_bytes=vmem_limit,
        ),
        cost_estimate=cost,
    )(x2d, t2d)

    # Tiny final combine in the wrapper: one cross-slice/sublane/lane reduce.
    sums = jnp.sum(partials, axis=(0, 2, 3))  # (3,) = [-bce_sum, sum(x*t), sum(x)+sum(t)]
    bce_loss = -sums[0] / jnp.float32(n)
    smooth = 1.0
    dice_loss = 1.0 - (2.0 * sums[1] + smooth) / (sums[2] + smooth)
    return bce_loss + dice_loss


def _reference(inputs, targets):
    x = inputs.astype(jnp.float32).reshape(-1)
    t = targets.astype(jnp.float32).reshape(-1)
    log_x = jnp.maximum(jnp.log(x), -100.0)
    log_1mx = jnp.maximum(jnp.log(1.0 - x), -100.0)
    bce = jnp.mean(-(t * log_x + (1.0 - t) * log_1mx))
    smooth = 1.0
    inter = jnp.sum(x * t)
    dice = 1.0 - (2.0 * inter + smooth) / (jnp.sum(x) + jnp.sum(t) + smooth)
    return bce + dice


if __name__ == "__main__":
    key = jax.random.PRNGKey(0)
    k1, k2, k3, k4 = jax.random.split(key, 4)

    # Case 1: [B, C, H, W] = [2, 4, 16, 16], f32, exact multiple of 128 lanes
    # (zero-copy path: pure reshape, single full block).
    x1 = jax.nn.sigmoid(jax.random.normal(k1, (2, 4, 16, 16), jnp.float32))
    t1 = (jax.random.uniform(k2, (2, 4, 16, 16)) > 0.5).astype(jnp.float32)
    out1 = jax.block_until_ready(dice_bce_loss(x1, t1))
    ref1 = jax.block_until_ready(_reference(x1, t1))
    np.testing.assert_allclose(np.asarray(out1), np.asarray(ref1),
                               rtol=1e-5, atol=1e-5)

    # Case 2: ragged element count (lane-tail pad + in-kernel row masking).
    x2 = jax.nn.sigmoid(jax.random.normal(k3, (3, 5, 7, 11), jnp.float32))
    t2 = (jax.random.uniform(k4, (3, 5, 7, 11)) > 0.5).astype(jnp.float32)
    out2 = jax.block_until_ready(dice_bce_loss(x2, t2))
    ref2 = jax.block_until_ready(_reference(x2, t2))
    np.testing.assert_allclose(np.asarray(out2), np.asarray(ref2),
                               rtol=1e-5, atol=1e-5)

    # Case 3: bf16 inputs, multi-step grid exercising both parallel slots.
    x3 = jax.nn.sigmoid(
        jax.random.normal(k1, (2, 8, 32, 64), jnp.float32)).astype(jnp.bfloat16)
    t3 = (jax.random.uniform(k2, (2, 8, 32, 64)) > 0.5).astype(jnp.bfloat16)
    out3 = jax.block_until_ready(dice_bce_loss(x3, t3, block_rows=32))
    ref3 = jax.block_until_ready(_reference(x3, t3))
    np.testing.assert_allclose(np.asarray(out3), np.asarray(ref3),
                               rtol=1e-4, atol=1e-4)

    # Case 4: multi-step grid whose last block is row-partial (masked in-kernel,
    # no padding copy).
    x4 = jax.nn.sigmoid(jax.random.normal(k3, (1, 3, 40, 128), jnp.float32))
    t4 = (jax.random.uniform(k4, (1, 3, 40, 128)) > 0.5).astype(jnp.float32)
    out4 = jax.block_until_ready(dice_bce_loss(x4, t4, block_rows=32))
    ref4 = jax.block_until_ready(_reference(x4, t4))
    np.testing.assert_allclose(np.asarray(out4), np.asarray(ref4),
                               rtol=1e-5, atol=1e-5)

    print("KERNEL_OK")
</pallas_src>

<mosaic_0001>
module attributes {stable_mosaic.version = 11 : i64} {
  func.func @kernel(%arg0: i32, %arg1: i32, %arg2: memref<16x128xf32, #tpu.memory_space<vmem>>, %arg3: memref<16x128xf32, #tpu.memory_space<vmem>>, %arg4: memref<1x3x8x128xf32, #tpu.memory_space<vmem>>) attributes {dimension_semantics = [#tpu.dimension_semantics<parallel>, #tpu.dimension_semantics<arbitrary>], iteration_bounds = array<i64: 1, 1>, scalar_prefetch = 0 : i64, scratch_operands = 0 : i64, tpu.core_type = #tpu.core_type<tc>, window_params = [{transform_indices = @transform_0, window_bounds = array<i64: 16, 128>}, {transform_indices = @transform_1, window_bounds = array<i64: 16, 128>}, {transform_indices = @transform_2, window_bounds = array<i64: 1, 3, 8, 128>}]} {
    %c0_i32 = arith.constant 0 : i32
    %0 = arith.cmpi eq, %arg1, %c0_i32 : i32
    %1 = arith.extui %0 : i1 to i32
    %c0_i32_0 = arith.constant 0 : i32
    %2 = arith.cmpi ne, %1, %c0_i32_0 : i32
    scf.if %2 {
      %cst_31 = arith.constant 0.000000e+00 : f32
      %42 = vector.broadcast %cst_31 : f32 to vector<3x8x128xf32>
      %c0_32 = arith.constant 0 : index
      %c0_33 = arith.constant 0 : index
      %c0_34 = arith.constant 0 : index
      %c0_35 = arith.constant 0 : index
      %43 = vector.load %arg4[%c0_32, %c0_33, %c0_34, %c0_35] : memref<1x3x8x128xf32, #tpu.memory_space<vmem>>, vector<1x3x8x128xf32>
      %44 = vector.shape_cast %43 : vector<1x3x8x128xf32> to vector<3x8x128xf32>
      %45 = vector.shape_cast %42 : vector<3x8x128xf32> to vector<1x3x8x128xf32>
      tpu.vector_store %arg4[%c0_32, %c0_33, %c0_34, %c0_35], %45 {strides = array<i32>} : memref<1x3x8x128xf32, #tpu.memory_space<vmem>>, vector<1x3x8x128xf32>,
    } else {
    }
    %c0 = arith.constant 0 : index
    %c0_1 = arith.constant 0 : index
    %3 = vector.load %arg2[%c0, %c0_1] : memref<16x128xf32, #tpu.memory_space<vmem>>, vector<16x128xf32>
    %c0_2 = arith.constant 0 : index
    %c0_3 = arith.constant 0 : index
    %4 = vector.load %arg3[%c0_2, %c0_3] : memref<16x128xf32, #tpu.memory_space<vmem>>, vector<16x128xf32>
    %5 = math.log %3 : vector<16x128xf32>
    %cst = arith.constant -1.000000e+02 : f32
    %6 = vector.broadcast %cst : f32 to vector<16x128xf32>
    %7 = arith.maximumf %5, %6 : vector<16x128xf32>
    %cst_4 = arith.constant 1.000000e+00 : f32
    %8 = vector.broadcast %cst_4 : f32 to vector<16x128xf32>
    %9 = arith.subf %8, %3 : vector<16x128xf32>
    %10 = math.log %9 : vector<16x128xf32>
    %cst_5 = arith.constant -1.000000e+02 : f32
    %11 = vector.broadcast %cst_5 : f32 to vector<16x128xf32>
    %12 = arith.maximumf %10, %11 : vector<16x128xf32>
    %13 = arith.subf %7, %12 : vector<16x128xf32>
    %14 = arith.mulf %4, %13 : vector<16x128xf32>
    %15 = arith.addf %14, %12 : vector<16x128xf32>
    %c0_6 = arith.constant 0 : index
    %c0_7 = arith.constant 0 : index
    %c0_8 = arith.constant 0 : index
    %c0_9 = arith.constant 0 : index
    %16 = vector.load %arg4[%c0_6, %c0_7, %c0_8, %c0_9] : memref<1x3x8x128xf32, #tpu.memory_space<vmem>>, vector<1x1x8x128xf32>
    %17 = vector.shape_cast %16 : vector<1x1x8x128xf32> to vector<8x128xf32>
    %18 = vector.shape_cast %15 : vector<16x128xf32> to vector<2x8x128xf32>
    %cst_10 = arith.constant dense<0.000000e+00> : vector<8x128xf32>
    %19 = vector.multi_reduction <add>, %18, %cst_10 [0] : vector<2x8x128xf32> to vector<8x128xf32>
    %20 = arith.addf %17, %19 : vector<8x128xf32>
    %c0_11 = arith.constant 0 : index
    %c0_12 = arith.constant 0 : index
    %c0_13 = arith.constant 0 : index
    %c0_14 = arith.constant 0 : index
    %21 = vector.load %arg4[%c0_11, %c0_12, %c0_13, %c0_14] : memref<1x3x8x128xf32, #tpu.memory_space<vmem>>, vector<1x1x8x128xf32>
    %22 = vector.shape_cast %21 : vector<1x1x8x128xf32> to vector<8x128xf32>
    %23 = vector.shape_cast %20 : vector<8x128xf32> to vector<1x1x8x128xf32>
    tpu.vector_store %arg4[%c0_11, %c0_12, %c0_13, %c0_14], %23 {strides = array<i32>} : memref<1x3x8x128xf32, #tpu.memory_space<vmem>>, vector<1x1x8x128xf32>,
    %c0_15 = arith.constant 0 : index
    %c1 = arith.constant 1 : index
    %c0_16 = arith.constant 0 : index
    %c0_17 = arith.constant 0 : index
    %24 = vector.load %arg4[%c0_15, %c1, %c0_16, %c0_17] : memref<1x3x8x128xf32, #tpu.memory_space<vmem>>, vector<1x1x8x128xf32>
    %25 = vector.shape_cast %24 : vector<1x1x8x128xf32> to vector<8x128xf32>
    %26 = arith.mulf %3, %4 : vector<16x128xf32>
    %27 = vector.shape_cast %26 : vector<16x128xf32> to vector<2x8x128xf32>
    %cst_18 = arith.constant dense<0.000000e+00> : vector<8x128xf32>
    %28 = vector.multi_reduction <add>, %27, %cst_18 [0] : vector<2x8x128xf32> to vector<8x128xf32>
    %29 = arith.addf %25, %28 : vector<8x128xf32>
    %c0_19 = arith.constant 0 : index
    %c1_20 = arith.constant 1 : index
    %c0_21 = arith.constant 0 : index
    %c0_22 = arith.constant 0 : index
    %30 = vector.load %arg4[%c0_19, %c1_20, %c0_21, %c0_22] : memref<1x3x8x128xf32, #tpu.memory_space<vmem>>, vector<1x1x8x128xf32>
    %31 = vector.shape_cast %30 : vector<1x1x8x128xf32> to vector<8x128xf32>
    %32 = vector.shape_cast %29 : vector<8x128xf32> to vector<1x1x8x128xf32>
    tpu.vector_store %arg4[%c0_19, %c1_20, %c0_21, %c0_22], %32 {strides = array<i32>} : memref<1x3x8x128xf32, #tpu.memory_space<vmem>>, vector<1x1x8x128xf32>,
    %c0_23 = arith.constant 0 : index
    %c2 = arith.constant 2 : index
    %c0_24 = arith.constant 0 : index
    %c0_25 = arith.constant 0 : index
    %33 = vector.load %arg4[%c0_23, %c2, %c0_24, %c0_25] : memref<1x3x8x128xf32, #tpu.memory_space<vmem>>, vector<1x1x8x128xf32>
    %34 = vector.shape_cast %33 : vector<1x1x8x128xf32> to vector<8x128xf32>
    %35 = arith.addf %3, %4 : vector<16x128xf32>
    %36 = vector.shape_cast %35 : vector<16x128xf32> to vector<2x8x128xf32>
    %cst_26 = arith.constant dense<0.000000e+00> : vector<8x128xf32>
    %37 = vector.multi_reduction <add>, %36, %cst_26 [0] : vector<2x8x128xf32> to vector<8x128xf32>
    %38 = arith.addf %34, %37 : vector<8x128xf32>
    %c0_27 = arith.constant 0 : index
    %c2_28 = arith.constant 2 : index
    %c0_29 = arith.constant 0 : index
    %c0_30 = arith.constant 0 : index
    %39 = vector.load %arg4[%c0_27, %c2_28, %c0_29, %c0_30] : memref<1x3x8x128xf32, #tpu.memory_space<vmem>>, vector<1x1x8x128xf32>
    %40 = vector.shape_cast %39 : vector<1x1x8x128xf32> to vector<8x128xf32>
    %41 = vector.shape_cast %38 : vector<8x128xf32> to vector<1x1x8x128xf32>
    tpu.vector_store %arg4[%c0_27, %c2_28, %c0_29, %c0_30], %41 {strides = array<i32>} : memref<1x3x8x128xf32, #tpu.memory_space<vmem>>, vector<1x1x8x128xf32>,
    return
  }
  func.func @transform_0(%arg0: i32, %arg1: i32) -> (i32, i32) {
    %c1_i32 = arith.constant 1 : i32
    %0 = arith.muli %arg0, %c1_i32 : i32
    %1 = arith.addi %0, %arg1 : i32
    %c0_i32 = arith.constant 0 : i32
    %c0_i32_0 = arith.constant 0 : i32
    return %1, %c0_i32 : i32, i32
  }
  func.func @transform_1(%arg0: i32, %arg1: i32) -> (i32, i32) {
    %c1_i32 = arith.constant 1 : i32
    %0 = arith.muli %arg0, %c1_i32 : i32
    %1 = arith.addi %0, %arg1 : i32
    %c0_i32 = arith.constant 0 : i32
    %c0_i32_0 = arith.constant 0 : i32
    return %1, %c0_i32 : i32, i32
  }
  func.func @transform_2(%arg0: i32, %arg1: i32) -> (i32, i32, i32, i32) {
    %c0_i32 = arith.constant 0 : i32
    %c0_i32_0 = arith.constant 0 : i32
    %c0_i32_1 = arith.constant 0 : i32
    %c0_i32_2 = arith.constant 0 : i32
    return %arg0, %c0_i32, %c0_i32_0, %c0_i32_1 : i32, i32, i32, i32
  }
}

</mosaic_0001>

<llo_original>
// kernel: tpu_custom_call.1
$region0: #{tpu_custom_call.1}
  #allocation0 [shape = 'u32[]', space=smem, size = 0x4, offset = 0x4, fixed_abs, tag = 'smem constant byte address 0x4 - core index']
  #allocation1 [shape = 'u32[144,128]{1,0:T(1,128)}', space=vmem, size = 0x12000, scoped, tag = 'internal scratch']
  %s0 = inlined_call_operand.hbm [shape: f32[16,128], index: 0, kind: input, shape index: {}]
  %s1 = inlined_call_operand.hbm [shape: f32[16,128], index: 1, kind: input, shape index: {}]
  %s2 = inlined_call_operand.hbm [shape: f32[1,3,8,128], index: 2, kind: output, shape index: {}]
  %s3 = sld [smem:[#allocation0]]
  $region30: #{tpu_custom_call.1} parent=0
    _
  %s5 = ssub.s32 1, %s3
  %s6 = scalar_select 0, %s5, %s3
  $region1: #{tpu_custom_call.1} parent=0
    #allocation2 [shape = 'u8[8192]{0}', space=vmem, size = 0x2000, scoped, tag = 'input window, operand 0, single buffered']
    #allocation3 [shape = 's32[1]{0}', space=sflag, size = 0x4, scoped, tag = 'scoped memory for tpu_custom_call.1']
    #allocation4 [shape = 's32[1]{0}', space=sflag, size = 0x4, scoped, tag = 'scoped memory for tpu_custom_call.1']
    #allocation5 [shape = 'u8[8192]{0}', space=vmem, size = 0x2000, scoped, tag = 'input window, operand 1, single buffered']
    #allocation6 [shape = 's32[1]{0}', space=sflag, size = 0x4, scoped, tag = 'scoped memory for tpu_custom_call.1']
    #allocation7 [shape = 'u8[12288]{0}', space=vmem, size = 0x3000, scoped, tag = 'output window, operand 0, single buffered']
    %7 = vsyncpa [#allocation3], 0
    %8 = vsyncpa [#allocation6], 0
    %9 = vsyncpa [#allocation4], 0
    // Predicated region
    $region2: #{tpu_custom_call.1} parent=1 // pred_check
      _
    $region3: #{tpu_custom_call.1} parent=1 // pred_check_branch
      %11 = sbr.rel (0) target = $region5
    $region4: #{tpu_custom_call.1} parent=1 // pred_region
      %s12 = sadd.s32 0, 0
      %s13 = smul.u32 2, %s12
      %s15 = ssub.s32 256, 256
      %16 = vsyncadd [#allocation3], %s15
      %s17 = smul.addr %s13, 128
      %s18 = scalar_lea.hbm %s0, %s17
      %s19 = sshll.u32 [#allocation2], 4
      %s20 = int_to_ptr.vmem [resolvable:$true] %s19
      %25 = dma.hbm_to_vmem [thread:$0]  %s18, 256, %s20, [#allocation3], 128, 128, 8
    $region5: #{tpu_custom_call.1} parent=1 // pred_fallthru
      _
    // Predicated region
    $region6: #{tpu_custom_call.1} parent=1 // pred_check
      _
    $region7: #{tpu_custom_call.1} parent=1 // pred_check_branch
      %27 = sbr.rel (0) target = $region9
    $region8: #{tpu_custom_call.1} parent=1 // pred_region
      %s28 = sadd.s32 0, 0
      %s29 = smul.u32 2, %s28
      %s31 = ssub.s32 256, 256
      %32 = vsyncadd [#allocation6], %s31
      %s33 = smul.addr %s29, 128
      %s34 = scalar_lea.hbm %s1, %s33
      %s35 = sshll.u32 [#allocation5], 4
      %s36 = int_to_ptr.vmem [resolvable:$true] %s35
      %41 = dma.hbm_to_vmem [thread:$0]  %s34, 256, %s36, [#allocation6], 128, 128, 8
    $region9: #{tpu_custom_call.1} parent=1 // pred_fallthru
      _
    // Predicated region
    $region10: #{tpu_custom_call.1} parent=1 // pred_check
      _
    $region11: #{tpu_custom_call.1} parent=1 // pred_check_branch
      %43 = sbr.rel (0) target = $region13
    $region12: #{tpu_custom_call.1} parent=1 // pred_region
      %44 = dma.done [#allocation3], 256
    $region13: #{tpu_custom_call.1} parent=1 // pred_fallthru
      _
    // Predicated region
    $region14: #{tpu_custom_call.1} parent=1 // pred_check
      _
    $region15: #{tpu_custom_call.1} parent=1 // pred_check_branch
      %46 = sbr.rel (0) target = $region17
    $region16: #{tpu_custom_call.1} parent=1 // pred_region
      %47 = dma.done [#allocation6], 256
    $region17: #{tpu_custom_call.1} parent=1 // pred_fallthru
      _
    %s48 = sadd.s32 0, 0
    %s49 = smul.u32 2, %s48
    %s50 = sadd.s32 0, 0
    %s51 = smul.u32 2, %s50
    %p52 = scmp.eq.s32.totalorder 0, 0
    // Predicated region
    $region18: #{tpu_custom_call.1} parent=1 // pred_check
      %p53 = pneg %p52
    $region19: #{tpu_custom_call.1} parent=1 // pred_check_branch
      %55 = sbr.rel (%p53) target = $region21
    $region20: #{tpu_custom_call.1} parent=1 // pred_region
      %56 = vst [vmem:[#allocation7] sm:$0xff] 0.0
      %57 = vst [vmem:[#allocation7 + $0x8] sm:$0xff] 0.0
      %58 = vst [vmem:[#allocation7 + $0x10] sm:$0xff] 0.0
    $region21: #{tpu_custom_call.1} parent=1 // pred_fallthru
      _
    %v59 = vld [vmem:[#allocation2] sm:$0xff]
    %v60 = vld [vmem:[#allocation2 + $0x8] sm:$0xff]
    %v61 = vld [vmem:[#allocation5] sm:$0xff]
    %v62 = vld [vmem:[#allocation5 + $0x8] sm:$0xff]
    %v63 = vlog2.pop %v59
    %v64 = vmul.f32 %v63, 0.6931472
    %v65 = vlog2.pop %v60
    %v66 = vmul.f32 %v65, 0.6931472
    %v67 = vmax.f32 %v64, -100.0
    %v68 = vmax.f32 %v66, -100.0
    %v69 = vsub.f32 1.0, %v59
    %v70 = vsub.f32 1.0, %v60
    %v71 = vlog2.pop %v69
    %v72 = vmul.f32 %v71, 0.6931472
    %v73 = vlog2.pop %v70
    %v74 = vmul.f32 %v73, 0.6931472
    %v75 = vmax.f32 %v72, -100.0
    %v76 = vmax.f32 %v74, -100.0
    %v77 = vsub.f32 %v67, %v75
    %v78 = vsub.f32 %v68, %v76
    %v79 = vmul.f32 %v61, %v77
    %v80 = vmul.f32 %v62, %v78
    %v81 = vadd.f32 %v79, %v75
    %v82 = vadd.f32 %v80, %v76
    %v83 = vld [vmem:[#allocation7] sm:$0xff]
    %v84 = vadd.f32 %v81, %v82
    %v85 = vadd.f32 %v83, %v84
    %86 = vst [vmem:[#allocation7] sm:$0xff] %v85
    %s87 = scalar_lea.vmem [#allocation7], 8
    %v88 = vld [vmem:[%s87] sm:$0xff]
    %v89 = vmul.f32 %v59, %v61
    %v90 = vmul.f32 %v60, %v62
    %v91 = vadd.f32 %v89, %v90
    %v92 = vadd.f32 %v88, %v91
    %93 = vst [vmem:[%s87] sm:$0xff] %v92
    %s94 = scalar_lea.vmem [#allocation7], 16
    %v95 = vld [vmem:[%s94] sm:$0xff]
    %v96 = vadd.f32 %v59, %v61
    %v97 = vadd.f32 %v60, %v62
    %v98 = vadd.f32 %v96, %v97
    %v99 = vadd.f32 %v95, %v98
    %100 = vst [vmem:[%s94] sm:$0xff] %v99
    // Predicated region
    $region22: #{tpu_custom_call.1} parent=1 // pred_check
      _
    $region23: #{tpu_custom_call.1} parent=1 // pred_check_branch
      %102 = sbr.rel (0) target = $region25
    $region24: #{tpu_custom_call.1} parent=1 // pred_region
      %s104 = ssub.s32 384, 384
      %105 = vsyncadd [#allocation4], %s104
      %s106 = sshll.u32 [#allocation7], 4
      %s107 = int_to_ptr.vmem [resolvable:$true] %s106
      %112 = dma.vmem_to_hbm [thread:$0]  %s107, 384, %s2, [#allocation4], 128, 128, 8
    $region25: #{tpu_custom_call.1} parent=1 // pred_fallthru
      _
    // Predicated region
    $region26: #{tpu_custom_call.1} parent=1 // pred_check
      _
    $region27: #{tpu_custom_call.1} parent=1 // pred_check_branch
      %114 = sbr.rel (0) target = $region29
    $region28: #{tpu_custom_call.1} parent=1 // pred_region
      %115 = dma.done [#allocation4], 384
    $region29: #{tpu_custom_call.1} parent=1 // pred_fallthru
      _
    %116 = vsyncpa [#allocation3], 1
    %117 = vsyncpa [#allocation6], 1
    %118 = vsyncpa [#allocation4], 1

</llo_original>
